<compile_context>
chip_gen: v7x
topology: tpu7x:2x2x1
jax: 0.10.0
libtpu: 0.0.40
codegen_flags: <defaults>
</compile_context>

<pallas_src>
import jax
import jax.numpy as jnp
from jax.experimental import pallas as pl
from jax.experimental.pallas import tpu as pltpu


# ----------------------------------------------------------------------------
# Helpers
# ----------------------------------------------------------------------------
def _round_up(x, m):
    return ((x + m - 1) // m) * m


def _pick_tile_b(B, max_tile=2048, min_grid=2):
    """Batch-tile picker.

    * as large as possible (amortizes per-grid-step pipeline overhead),
    * but small enough that the grid has >= min_grid steps so the "parallel"
      axis can shard across v7x's two TensorCores (harmless on v5e/v6e),
    * capped at max_tile (2048 keeps the double-buffered f32 x/out tiles well
      inside v5e's 16 MiB default scoped-VMEM budget; raise on v6e/v7x).
    """
    target = _round_up(max(1, pl.cdiv(B, min_grid)), 8)
    return max(8, min(max_tile, target))


# ----------------------------------------------------------------------------
# Fused kernel: all SIREN layers + final linear in one body
# ----------------------------------------------------------------------------
def _make_fused_kernel(num_siren_layers, compute_dtype, pack_rows):
    """Kernel args: (x, w0, b0, w1, b1, ..., w_final, b_final, out)."""

    def kernel(*refs):
        x_ref = refs[0]
        out_ref = refs[-1]
        p = refs[1:-1]

        h = x_ref[...].astype(jnp.float32)
        k = 0
        for _ in range(num_siren_layers):
            w_ref, b_ref = p[k], p[k + 1]
            k += 2
            z = jnp.dot(
                h.astype(compute_dtype),
                w_ref[...],
                preferred_element_type=jnp.float32,
            )
            h = jnp.sin(z + b_ref[...])          # f32 bias add + sin
        wf_ref, bf_ref = p[k], p[k + 1]
        out = jnp.dot(
            h.astype(compute_dtype),
            wf_ref[...],
            preferred_element_type=jnp.float32,
        ) + bf_ref[...]
        if pack_rows > 1:
            tb, od = out.shape
            # Row-major sublane->lane repack: (tile_b, od) -> (tile_b/r, r*od)
            # with r*od == 128, so the output store is lane-dense (unmasked
            # vst) instead of a 16/128-lane masked store + strided writeback.
            out = out.reshape(tb // pack_rows, pack_rows * od)
        out_ref[...] = out.astype(out_ref.dtype)

    return kernel


def encoder_forward(x, folded_siren, final_params, *, compute_dtype=jnp.bfloat16,
                    tile_b=None, max_tile=2048, pack_output=True):
    """Fused forward pass.

    x:            [B, input_dim] float32
    folded_siren: list of (W' [Din, Dout*F] compute_dtype, b' [1, Dout*F] f32)
    final_params: (Wf [Din, Dout] compute_dtype, bf [1, Dout] f32)

    compute_dtype=jnp.float32 is a parity-testing path only; keep bf16 for
    production (f32 matmuls decompose into multiple MXU passes on v6e/v7x).
    """
    B, din0 = x.shape
    out_dim = final_params[0].shape[1]

    if tile_b is None:
        tile_b = _pick_tile_b(B, max_tile=max_tile)
    tile_b = max(8, _round_up(min(tile_b, _round_up(B, 8)), 8))

    grid_n = pl.cdiv(B, tile_b)
    B_pad = grid_n * tile_b
    if B_pad != B:
        # Padded-edge tile instead of a tile_b == B fallback (robustness:
        # avoids spills / VMEM cliffs and keeps >= 2 grid steps when possible).
        x = jnp.pad(x, ((0, B_pad - B), (0, 0)))

    # Lane-dense output packing (only when it tiles cleanly).
    pack_rows = 1
    if pack_output and out_dim < 128 and 128 % out_dim == 0:
        r = 128 // out_dim
        if tile_b % (8 * r) == 0:          # keep the packed block (8,128)-tiled
            pack_rows = r

    kernel = _make_fused_kernel(len(folded_siren), compute_dtype, pack_rows)

    params = []
    in_specs = [pl.BlockSpec((tile_b, din0), lambda i: (i, 0))]
    for w, b in list(folded_siren) + [final_params]:
        params += [w, b]
        # Weights/biases: constant index_map -> VMEM-resident across the grid.
        in_specs += [
            pl.BlockSpec(w.shape, lambda i: (0, 0)),
            pl.BlockSpec(b.shape, lambda i: (0, 0)),
        ]

    if pack_rows > 1:
        out_shape = jax.ShapeDtypeStruct((B_pad // pack_rows, out_dim * pack_rows),
                                         jnp.float32)
        out_block = (tile_b // pack_rows, out_dim * pack_rows)
    else:
        out_shape = jax.ShapeDtypeStruct((B_pad, out_dim), jnp.float32)
        out_block = (tile_b, out_dim)

    out = pl.pallas_call(
        kernel,
        out_shape=out_shape,
        grid=(grid_n,),
        in_specs=in_specs,
        out_specs=pl.BlockSpec(out_block, lambda i: (i, 0)),
        compiler_params=pltpu.CompilerParams(
            dimension_semantics=("parallel",),
            # Explicit headroom (v5e default scoped VMEM is only 16 MiB);
            # 32 MiB is safe on every generation (v7x physical = 64 MiB/TC).
            vmem_limit_bytes=32 * 1024 * 1024,
        ),
    )(x, *params)

    if pack_rows > 1:
        out = out.reshape(B_pad, out_dim)      # free, outside the kernel
    if B_pad != B:
        out = out[:B]
    return out


# ----------------------------------------------------------------------------
# Parameter construction (mirrors the PyTorch __init__ shapes / init scheme)
# ----------------------------------------------------------------------------
def init_params(key, input_dim, hidden_dim, output_dim, num_layers=3,
                num_frequencies=4, omega_init_range=(1.0, 60.0)):
    low, high = omega_init_range
    siren = []
    in_dims = [input_dim] + [hidden_dim * num_frequencies] * (num_layers - 2)
    for li, din in enumerate(in_dims):
        key, kw, kb = jax.random.split(key, 3)
        w_bound = (1.0 / din) if li == 0 else (6.0 / din)    # SIREN _init_weights
        w = jax.random.uniform(kw, (hidden_dim, din), jnp.float32, -w_bound, w_bound)
        b_bound = 1.0 / float(jnp.sqrt(float(din)))          # nn.Linear bias default
        b = jax.random.uniform(kb, (hidden_dim,), jnp.float32, -b_bound, b_bound)
        omega = jnp.linspace(low, high, num_frequencies, dtype=jnp.float32)
        siren.append((w, b, omega))
    din = hidden_dim * num_frequencies
    key, kw, kb = jax.random.split(key, 3)
    bound = 1.0 / float(jnp.sqrt(float(din)))
    wf = jax.random.uniform(kw, (output_dim, din), jnp.float32, -bound, bound)
    bf = jax.random.uniform(kb, (output_dim,), jnp.float32, -bound, bound)
    return siren, (wf, bf)


def fold_params(siren, final, *, compute_dtype=jnp.bfloat16):
    """Fold omega into W/b and transpose to [in, out] layout for x @ W form."""
    folded = []
    for w, b, omega in siren:
        wt = w.T                                                  # [Din, Dout]
        w_fold = (wt[:, :, None] * omega[None, None, :]).reshape(wt.shape[0], -1)
        b_fold = (b[:, None] * omega[None, :]).reshape(1, -1)
        folded.append((w_fold.astype(compute_dtype), b_fold.astype(jnp.float32)))
    wf, bf = final
    final_p = (wf.T.astype(compute_dtype), bf.reshape(1, -1).astype(jnp.float32))
    return folded, final_p


# Pure-JAX reference implementing the identical (omega-folded) math, used to
# verify the Pallas kernel at the same compute dtype.
def encoder_reference(x, folded_siren, final_params, compute_dtype):
    h = x.astype(jnp.float32)
    for w, b in folded_siren:
        z = jnp.dot(h.astype(compute_dtype), w, preferred_element_type=jnp.float32)
        h = jnp.sin(z + b)
    wf, bf = final_params
    return jnp.dot(h.astype(compute_dtype), wf, preferred_element_type=jnp.float32) + bf


if __name__ == "__main__":
    input_dim, hidden_dim, output_dim = 3, 32, 16
    num_layers, num_frequencies = 3, 4

    key = jax.random.PRNGKey(0)
    key, kx, kx2, kp = jax.random.split(key, 4)

    siren, final = init_params(
        kp, input_dim, hidden_dim, output_dim,
        num_layers=num_layers, num_frequencies=num_frequencies,
        omega_init_range=(1.0, 60.0),
    )
    folded32, final32 = fold_params(siren, final, compute_dtype=jnp.float32)
    folded16, final16 = fold_params(siren, final, compute_dtype=jnp.bfloat16)

    # --- small batch, f32: exact torch-equivalent math, tight parity ----------
    x_small = jax.random.normal(kx, (32, input_dim), jnp.float32)
    out32 = jax.block_until_ready(
        encoder_forward(x_small, folded32, final32, compute_dtype=jnp.float32))
    ref32 = encoder_reference(x_small, folded32, final32, jnp.float32)
    assert out32.shape == (32, output_dim)
    assert jnp.allclose(out32, ref32, atol=1e-4, rtol=1e-4)

    # --- ragged batch (B=30, not a multiple of 8): exercises pad/slice path ---
    out30 = jax.block_until_ready(
        encoder_forward(x_small[:30], folded32, final32, compute_dtype=jnp.float32))
    assert out30.shape == (30, output_dim)
    assert jnp.allclose(out30, ref32[:30], atol=1e-4, rtol=1e-4)

    # --- larger batch, bf16 MXU path: grid >= 2 + lane-dense packed output ----
    # TODO(synk): bf16 folding of omega (up to 60) costs ~2^-8 relative phase
    # error per layer vs the f32 path; keep the f32 path for strict parity.
    x_large = jax.random.normal(kx2, (1024, input_dim), jnp.float32)
    out16 = jax.block_until_ready(
        encoder_forward(x_large, folded16, final16, compute_dtype=jnp.bfloat16))
    ref16 = encoder_reference(x_large, folded16, final16, jnp.bfloat16)
    assert out16.shape == (1024, output_dim)
    assert jnp.allclose(out16, ref16, atol=5e-3, rtol=5e-3)

    print("KERNEL_OK")
</pallas_src>

<mosaic_0001>
module attributes {stable_mosaic.version = 11 : i64} {
  func.func @kernel(%arg0: i32, %arg1: memref<16x3xf32, #tpu.memory_space<vmem>>, %arg2: memref<3x128xf32, #tpu.memory_space<vmem>>, %arg3: memref<1x128xf32, #tpu.memory_space<vmem>>, %arg4: memref<128x128xf32, #tpu.memory_space<vmem>>, %arg5: memref<1x128xf32, #tpu.memory_space<vmem>>, %arg6: memref<128x16xf32, #tpu.memory_space<vmem>>, %arg7: memref<1x16xf32, #tpu.memory_space<vmem>>, %arg8: memref<16x16xf32, #tpu.memory_space<vmem>>) attributes {dimension_semantics = [#tpu.dimension_semantics<parallel>], iteration_bounds = array<i64: 2>, scalar_prefetch = 0 : i64, scratch_operands = 0 : i64, tpu.core_type = #tpu.core_type<tc>, window_params = [{transform_indices = @transform_0, window_bounds = array<i64: 16, 3>}, {pipeline_mode = #tpu.pipeline_mode<synchronous>, transform_indices = @transform_1, window_bounds = array<i64: 3, 128>}, {pipeline_mode = #tpu.pipeline_mode<synchronous>, transform_indices = @transform_2, window_bounds = array<i64: 1, 128>}, {pipeline_mode = #tpu.pipeline_mode<synchronous>, transform_indices = @transform_3, window_bounds = array<i64: 128, 128>}, {pipeline_mode = #tpu.pipeline_mode<synchronous>, transform_indices = @transform_4, window_bounds = array<i64: 1, 128>}, {pipeline_mode = #tpu.pipeline_mode<synchronous>, transform_indices = @transform_5, window_bounds = array<i64: 128, 16>}, {pipeline_mode = #tpu.pipeline_mode<synchronous>, transform_indices = @transform_6, window_bounds = array<i64: 1, 16>}, {transform_indices = @transform_7, window_bounds = array<i64: 16, 16>}]} {
    %c0 = arith.constant 0 : index
    %c0_0 = arith.constant 0 : index
    %0 = vector.load %arg1[%c0, %c0_0] : memref<16x3xf32, #tpu.memory_space<vmem>>, vector<16x3xf32>
    %c0_1 = arith.constant 0 : index
    %c0_2 = arith.constant 0 : index
    %1 = vector.load %arg2[%c0_1, %c0_2] : memref<3x128xf32, #tpu.memory_space<vmem>>, vector<3x128xf32>
    %cst = arith.constant dense<0.000000e+00> : vector<16x128xf32>
    %2 = tpu.matmul %0, %1, %cst {dimension_numbers = #tpu.dot_dimension_numbers<[1], [0], [0], [1], [0, 0, 1, 1], [], []>} : vector<16x3xf32>, vector<3x128xf32>, vector<16x128xf32> -> vector<16x128xf32>
    %c0_3 = arith.constant 0 : index
    %c0_4 = arith.constant 0 : index
    %3 = vector.load %arg3[%c0_3, %c0_4] : memref<1x128xf32, #tpu.memory_space<vmem>>, vector<1x128xf32>
    %4 = vector.broadcast %3 : vector<1x128xf32> to vector<16x128xf32>
    %5 = arith.addf %2, %4 : vector<16x128xf32>
    %6 = math.sin %5 : vector<16x128xf32>
    %c0_5 = arith.constant 0 : index
    %c0_6 = arith.constant 0 : index
    %7 = vector.load %arg4[%c0_5, %c0_6] : memref<128x128xf32, #tpu.memory_space<vmem>>, vector<128x128xf32>
    %cst_7 = arith.constant dense<0.000000e+00> : vector<16x128xf32>
    %8 = tpu.matmul %6, %7, %cst_7 {dimension_numbers = #tpu.dot_dimension_numbers<[1], [0], [0], [1], [0, 0, 1, 1], [], []>} : vector<16x128xf32>, vector<128x128xf32>, vector<16x128xf32> -> vector<16x128xf32>
    %c0_8 = arith.constant 0 : index
    %c0_9 = arith.constant 0 : index
    %9 = vector.load %arg5[%c0_8, %c0_9] : memref<1x128xf32, #tpu.memory_space<vmem>>, vector<1x128xf32>
    %10 = vector.broadcast %9 : vector<1x128xf32> to vector<16x128xf32>
    %11 = arith.addf %8, %10 : vector<16x128xf32>
    %12 = math.sin %11 : vector<16x128xf32>
    %c0_10 = arith.constant 0 : index
    %c0_11 = arith.constant 0 : index
    %13 = vector.load %arg6[%c0_10, %c0_11] : memref<128x16xf32, #tpu.memory_space<vmem>>, vector<128x16xf32>
    %cst_12 = arith.constant dense<0.000000e+00> : vector<16x16xf32>
    %14 = tpu.matmul %12, %13, %cst_12 {dimension_numbers = #tpu.dot_dimension_numbers<[1], [0], [0], [1], [0, 0, 1, 1], [], []>} : vector<16x128xf32>, vector<128x16xf32>, vector<16x16xf32> -> vector<16x16xf32>
    %c0_13 = arith.constant 0 : index
    %c0_14 = arith.constant 0 : index
    %15 = vector.load %arg7[%c0_13, %c0_14] : memref<1x16xf32, #tpu.memory_space<vmem>>, vector<1x16xf32>
    %16 = vector.broadcast %15 : vector<1x16xf32> to vector<16x16xf32>
    %17 = arith.addf %14, %16 : vector<16x16xf32>
    %c0_15 = arith.constant 0 : index
    %c0_16 = arith.constant 0 : index
    %18 = vector.load %arg8[%c0_15, %c0_16] : memref<16x16xf32, #tpu.memory_space<vmem>>, vector<16x16xf32>
    tpu.vector_store %arg8[%c0_15, %c0_16], %17 {strides = array<i32>} : memref<16x16xf32, #tpu.memory_space<vmem>>, vector<16x16xf32>,
    return
  }
  func.func @transform_0(%arg0: i32) -> (i32, i32) {
    %c0_i32 = arith.constant 0 : i32
    %c0_i32_0 = arith.constant 0 : i32
    return %arg0, %c0_i32 : i32, i32
  }
  func.func @transform_1(%arg0: i32) -> (i32, i32) {
    %c0_i32 = arith.constant 0 : i32
    %c0_i32_0 = arith.constant 0 : i32
    %c0_i32_1 = arith.constant 0 : i32
    return %c0_i32, %c0_i32_0 : i32, i32
  }
  func.func @transform_2(%arg0: i32) -> (i32, i32) {
    %c0_i32 = arith.constant 0 : i32
    %c0_i32_0 = arith.constant 0 : i32
    %c0_i32_1 = arith.constant 0 : i32
    return %c0_i32, %c0_i32_0 : i32, i32
  }
  func.func @transform_3(%arg0: i32) -> (i32, i32) {
    %c0_i32 = arith.constant 0 : i32
    %c0_i32_0 = arith.constant 0 : i32
    %c0_i32_1 = arith.constant 0 : i32
    return %c0_i32, %c0_i32_0 : i32, i32
  }
  func.func @transform_4(%arg0: i32) -> (i32, i32) {
    %c0_i32 = arith.constant 0 : i32
    %c0_i32_0 = arith.constant 0 : i32
    %c0_i32_1 = arith.constant 0 : i32
    return %c0_i32, %c0_i32_0 : i32, i32
  }
  func.func @transform_5(%arg0: i32) -> (i32, i32) {
    %c0_i32 = arith.constant 0 : i32
    %c0_i32_0 = arith.constant 0 : i32
    %c0_i32_1 = arith.constant 0 : i32
    return %c0_i32, %c0_i32_0 : i32, i32
  }
  func.func @transform_6(%arg0: i32) -> (i32, i32) {
    %c0_i32 = arith.constant 0 : i32
    %c0_i32_0 = arith.constant 0 : i32
    %c0_i32_1 = arith.constant 0 : i32
    return %c0_i32, %c0_i32_0 : i32, i32
  }
  func.func @transform_7(%arg0: i32) -> (i32, i32) {
    %c0_i32 = arith.constant 0 : i32
    %c0_i32_0 = arith.constant 0 : i32
    return %arg0, %c0_i32 : i32, i32
  }
}

</mosaic_0001>

<llo_original>
// kernel: tpu_custom_call.1
$region0: #{tpu_custom_call.1}
  #allocation0 [shape = 'u32[]', space=smem, size = 0x4, offset = 0x4, fixed_abs, tag = 'smem constant byte address 0x4 - core index']
  #allocation1 [shape = 'u32[144,128]{1,0:T(1,128)}', space=vmem, size = 0x12000, scoped, tag = 'internal scratch']
  %s0 = inlined_call_operand.vmem [shape: f32[32,3], index: 0, kind: input, shape index: {}]
  %s1 = inlined_call_operand.vmem [shape: f32[3,128], index: 1, kind: input, shape index: {}]
  %s2 = inlined_call_operand.vmem [shape: f32[1,128], index: 2, kind: input, shape index: {}]
  %s3 = inlined_call_operand.vmem [shape: f32[128,128], index: 3, kind: input, shape index: {}]
  %s4 = inlined_call_operand.vmem [shape: f32[1,128], index: 4, kind: input, shape index: {}]
  %s5 = inlined_call_operand.vmem [shape: f32[128,16], index: 5, kind: input, shape index: {}]
  %s6 = inlined_call_operand.vmem [shape: f32[1,16], index: 6, kind: input, shape index: {}]
  %s7 = inlined_call_operand.vmem [shape: f32[32,16], index: 7, kind: output, shape index: {}]
  %s8 = sld [smem:[#allocation0]]
  $region61: #{tpu_custom_call.1} parent=0
    _
  %s10 = ssub.s32 1, %s8
  %s11 = scalar_select 0, %s10, %s8
  loop: start=0, step=1, limit=4
  $region2: #{tpu_custom_call.1} parent=0 // loop_pre_header
    _
  $region3: #{tpu_custom_call.1} parent=0 // loop_header
    %s13 = sphi 0, %s17
    %p14 = scmp.ge.s32.totalorder %s13, 4
    %s23 = sphi 0, %s25
    %s26 = sphi 0, %s23
    %s27 = sphi 0, %s26
    %s43 = sphi 0, %s27
    %s47 = sphi 0, %s47
    %s49 = sphi 0, %s47
    %s50 = sphi 0, %s49
    %s64 = sphi 0, %s50
    %s68 = sphi 0, %s68
    %s70 = sphi 0, %s68
    %s71 = sphi 0, %s70
    %s85 = sphi 0, %s71
    %s89 = sphi 0, %s89
    %s91 = sphi 0, %s89
    %s92 = sphi 0, %s91
    %s106 = sphi 0, %s92
    %s110 = sphi 0, %s110
    %s112 = sphi 0, %s110
    %s113 = sphi 0, %s112
    %s127 = sphi 0, %s113
    %s131 = sphi 0, %s131
    %s133 = sphi 0, %s131
    %s134 = sphi 0, %s133
    %s148 = sphi 0, %s134
    %s152 = sphi 0, %s152
    %s154 = sphi 0, %s152
    %s155 = sphi 0, %s154
    %s169 = sphi 0, %s155
    %s175 = sphi 0, %s177
    %s178 = sphi 0, %s175
    %s179 = sphi 0, %s178
    %s195 = sphi 0, %s179
  $region4: #{tpu_custom_call.1} parent=0 // loop_header_branch
    %16 = sbr.rel (%p14) target = $region8
  $region5: #{tpu_custom_call.1} parent=0 // loop_body
    %s18 = ssub.s32 %s13, 1
    %s19 = ssub.s32 %s13, 2
    %s20 = sadd.s32 %s13, 1
    %s21 = ssub.s32 %s13, %s20
    %p22 = scmp.eq.s32.totalorder %s21, 0
    %s24 = sadd.s32 %s23, 1
    %s25 = scalar_select %p22, %s23, %s24
    %p28 = pneg %p22
    %p29 = scmp.eq.s32.totalorder %s13, 1
    %p30 = por %p28, %p29
    %p31 = scmp.ne.s32.totalorder %s23, %s26
    %p32 = scmp.eq.s32.totalorder %s13, 0
    %p33 = por %p31, %p32
    %p34 = scmp.ne.s32.totalorder %s23, %s26
    %p35 = scmp.eq.s32.totalorder %s18, 1
    %p36 = por %p34, %p35
    %p37 = scmp.ne.s32.totalorder %s26, %s27
    %p38 = scmp.eq.s32.totalorder %s18, 0
    %p39 = por %p37, %p38
    %p40 = scmp.ne.s32.totalorder %s26, %s27
    %p41 = scmp.eq.s32.totalorder %s19, 1
    %p42 = por %p40, %p41
    %p44 = scmp.ne.s32.totalorder %s27, %s43
    %p45 = scmp.eq.s32.totalorder %s19, 0
    %p46 = por %p44, %p45
    %s48 = sadd.s32 %s47, 1
    %p51 = scmp.eq.s32.totalorder %s13, 1
    %p52 = scmp.ne.s32.totalorder %s47, %s49
    %p53 = scmp.eq.s32.totalorder %s13, 0
    %p54 = por %p52, %p53
    %p55 = scmp.ne.s32.totalorder %s47, %s49
    %p56 = scmp.eq.s32.totalorder %s18, 1
    %p57 = por %p55, %p56
    %p58 = scmp.ne.s32.totalorder %s49, %s50
    %p59 = scmp.eq.s32.totalorder %s18, 0
    %p60 = por %p58, %p59
    %p61 = scmp.ne.s32.totalorder %s49, %s50
    %p62 = scmp.eq.s32.totalorder %s19, 1
    %p63 = por %p61, %p62
    %p65 = scmp.ne.s32.totalorder %s50, %s64
    %p66 = scmp.eq.s32.totalorder %s19, 0
    %p67 = por %p65, %p66
    %s69 = sadd.s32 %s68, 1
    %p72 = scmp.eq.s32.totalorder %s13, 1
    %p73 = scmp.ne.s32.totalorder %s68, %s70
    %p74 = scmp.eq.s32.totalorder %s13, 0
    %p75 = por %p73, %p74
    %p76 = scmp.ne.s32.totalorder %s68, %s70
    %p77 = scmp.eq.s32.totalorder %s18, 1
    %p78 = por %p76, %p77
    %p79 = scmp.ne.s32.totalorder %s70, %s71
    %p80 = scmp.eq.s32.totalorder %s18, 0
    %p81 = por %p79, %p80
    %p82 = scmp.ne.s32.totalorder %s70, %s71
    %p83 = scmp.eq.s32.totalorder %s19, 1
    %p84 = por %p82, %p83
    %p86 = scmp.ne.s32.totalorder %s71, %s85
    %p87 = scmp.eq.s32.totalorder %s19, 0
    %p88 = por %p86, %p87
    %s90 = sadd.s32 %s89, 1
    %p93 = scmp.eq.s32.totalorder %s13, 1
    %p94 = scmp.ne.s32.totalorder %s89, %s91
    %p95 = scmp.eq.s32.totalorder %s13, 0
    %p96 = por %p94, %p95
    %p97 = scmp.ne.s32.totalorder %s89, %s91
    %p98 = scmp.eq.s32.totalorder %s18, 1
    %p99 = por %p97, %p98
    %p100 = scmp.ne.s32.totalorder %s91, %s92
    %p101 = scmp.eq.s32.totalorder %s18, 0
    %p102 = por %p100, %p101
    %p103 = scmp.ne.s32.totalorder %s91, %s92
    %p104 = scmp.eq.s32.totalorder %s19, 1
    %p105 = por %p103, %p104
    %p107 = scmp.ne.s32.totalorder %s92, %s106
    %p108 = scmp.eq.s32.totalorder %s19, 0
    %p109 = por %p107, %p108
    %s111 = sadd.s32 %s110, 1
    %p114 = scmp.eq.s32.totalorder %s13, 1
    %p115 = scmp.ne.s32.totalorder %s110, %s112
    %p116 = scmp.eq.s32.totalorder %s13, 0
    %p117 = por %p115, %p116
    %p118 = scmp.ne.s32.totalorder %s110, %s112
    %p119 = scmp.eq.s32.totalorder %s18, 1
    %p120 = por %p118, %p119
    %p121 = scmp.ne.s32.totalorder %s112, %s113
    %p122 = scmp.eq.s32.totalorder %s18, 0
    %p123 = por %p121, %p122
    %p124 = scmp.ne.s32.totalorder %s112, %s113
    %p125 = scmp.eq.s32.totalorder %s19, 1
    %p126 = por %p124, %p125
    %p128 = scmp.ne.s32.totalorder %s113, %s127
    %p129 = scmp.eq.s32.totalorder %s19, 0
    %p130 = por %p128, %p129
    %s132 = sadd.s32 %s131, 1
    %p135 = scmp.eq.s32.totalorder %s13, 1
    %p136 = scmp.ne.s32.totalorder %s131, %s133
    %p137 = scmp.eq.s32.totalorder %s13, 0
    %p138 = por %p136, %p137
    %p139 = scmp.ne.s32.totalorder %s131, %s133
    %p140 = scmp.eq.s32.totalorder %s18, 1
    %p141 = por %p139, %p140
    %p142 = scmp.ne.s32.totalorder %s133, %s134
    %p143 = scmp.eq.s32.totalorder %s18, 0
    %p144 = por %p142, %p143
    %p145 = scmp.ne.s32.totalorder %s133, %s134
    %p146 = scmp.eq.s32.totalorder %s19, 1
    %p147 = por %p145, %p146
    %p149 = scmp.ne.s32.totalorder %s134, %s148
    %p150 = scmp.eq.s32.totalorder %s19, 0
    %p151 = por %p149, %p150
    %s153 = sadd.s32 %s152, 1
    %p156 = scmp.eq.s32.totalorder %s13, 1
    %p157 = scmp.ne.s32.totalorder %s152, %s154
    %p158 = scmp.eq.s32.totalorder %s13, 0
    %p159 = por %p157, %p158
    %p160 = scmp.ne.s32.totalorder %s152, %s154
    %p161 = scmp.eq.s32.totalorder %s18, 1
    %p162 = por %p160, %p161
    %p163 = scmp.ne.s32.totalorder %s154, %s155
    %p164 = scmp.eq.s32.totalorder %s18, 0
    %p165 = por %p163, %p164
    %p166 = scmp.ne.s32.totalorder %s154, %s155
    %p167 = scmp.eq.s32.totalorder %s19, 1
    %p168 = por %p166, %p167
    %p170 = scmp.ne.s32.totalorder %s155, %s169
    %p171 = scmp.eq.s32.totalorder %s19, 0
    %p172 = por %p170, %p171
    %s173 = ssub.s32 %s13, %s20
    %p174 = scmp.eq.s32.totalorder %s173, 0
    %s176 = sadd.s32 %s175, 1
    %s177 = scalar_select %p174, %s175, %s176
    %p180 = pneg %p174
    %p181 = scmp.eq.s32.totalorder %s13, 1
    %p182 = por %p180, %p181
    %p183 = scmp.ne.s32.totalorder %s175, %s178
    %p184 = scmp.eq.s32.totalorder %s13, 0
    %p185 = por %p183, %p184
    %p186 = scmp.ne.s32.totalorder %s175, %s178
    %p187 = scmp.eq.s32.totalorder %s18, 1
    %p188 = por %p186, %p187
    %p189 = scmp.ne.s32.totalorder %s178, %s179
    %p190 = scmp.eq.s32.totalorder %s18, 0
    %p191 = por %p189, %p190
    %p192 = scmp.ne.s32.totalorder %s178, %s179
    %p193 = scmp.eq.s32.totalorder %s19, 1
    %p194 = por %p192, %p193
    %p196 = scmp.ne.s32.totalorder %s179, %s195
    %p197 = scmp.eq.s32.totalorder %s19, 0
    %p198 = por %p196, %p197
    %p199 = scmp.le.s32.totalorder 1, %s13
    %p200 = scmp.lt.s32.totalorder %s13, 3
    %p201 = pnand %p199, %p200
    %p202 = pneg %p201
    // Predicated region
    $region9: #{tpu_custom_call.1} parent=5 // pred_check
      _
    $region10: #{tpu_custom_call.1} parent=5 // pred_check_branch
      %204 = sbr.rel (%p201) target = $region12
    $region11: #{tpu_custom_call.1} parent=5 // pred_region
      %s205 = ssub.s32 %s13, 1
      // Predicated region
      $region13: #{tpu_custom_call.1} parent=11 // pred_check
        %p206 = pneg %p60
      $region14: #{tpu_custom_call.1} parent=11 // pred_check_branch
        %208 = sbr.rel (%p206) target = $region16
      $region15: #{tpu_custom_call.1} parent=11 // pred_region
        _
      $region16: #{tpu_custom_call.1} parent=11 // pred_fallthru
        _
      // Predicated region
      $region17: #{tpu_custom_call.1} parent=11 // pred_check
        %p209 = pneg %p81
      $region18: #{tpu_custom_call.1} parent=11 // pred_check_branch
        %211 = sbr.rel (%p209) target = $region20
      $region19: #{tpu_custom_call.1} parent=11 // pred_region
        _
      $region20: #{tpu_custom_call.1} parent=11 // pred_fallthru
        _
      // Predicated region
      $region21: #{tpu_custom_call.1} parent=11 // pred_check
        %p212 = pneg %p102
      $region22: #{tpu_custom_call.1} parent=11 // pred_check_branch
        %214 = sbr.rel (%p212) target = $region24
      $region23: #{tpu_custom_call.1} parent=11 // pred_region
        _
      $region24: #{tpu_custom_call.1} parent=11 // pred_fallthru
        _
      // Predicated region
      $region25: #{tpu_custom_call.1} parent=11 // pred_check
        %p215 = pneg %p123
      $region26: #{tpu_custom_call.1} parent=11 // pred_check_branch
        %217 = sbr.rel (%p215) target = $region28
      $region27: #{tpu_custom_call.1} parent=11 // pred_region
        _
      $region28: #{tpu_custom_call.1} parent=11 // pred_fallthru
        _
      // Predicated region
      $region29: #{tpu_custom_call.1} parent=11 // pred_check
        %p218 = pneg %p144
      $region30: #{tpu_custom_call.1} parent=11 // pred_check_branch
        %220 = sbr.rel (%p218) target = $region32
      $region31: #{tpu_custom_call.1} parent=11 // pred_region
        _
      $region32: #{tpu_custom_call.1} parent=11 // pred_fallthru
        _
      // Predicated region
      $region33: #{tpu_custom_call.1} parent=11 // pred_check
        %p221 = pneg %p165
      $region34: #{tpu_custom_call.1} parent=11 // pred_check_branch
        %223 = sbr.rel (%p221) target = $region36
      $region35: #{tpu_custom_call.1} parent=11 // pred_region
        _
      $region36: #{tpu_custom_call.1} parent=11 // pred_fallthru
        _
    $region12: #{tpu_custom_call.1} parent=5 // pred_fallthru
      _
    %p224 = scmp.lt.s32.totalorder %s13, 2
    // Predicated region
    $region37: #{tpu_custom_call.1} parent=5 // pred_check
      %p225 = pneg %p224
    $region38: #{tpu_custom_call.1} parent=5 // pred_check_branch
      %227 = sbr.rel (%p225) target = $region40
    $region39: #{tpu_custom_call.1} parent=5 // pred_region
      // Predicated region
      $region41: #{tpu_custom_call.1} parent=39 // pred_check
        %p228 = pneg %p33
      $region42: #{tpu_custom_call.1} parent=39 // pred_check_branch
        %230 = sbr.rel (%p228) target = $region44
      $region43: #{tpu_custom_call.1} parent=39 // pred_region
        %s231 = smul.u32 2, %s13
        %p232 = scmp.lt.s32.totalorder %s231, 3
        %s233 = scalar_select %p232, %s231, 3
        %s234 = smul.addr %s233, 8
        %s235 = scalar_lea.vmem %s0, %s234
        %s236 = smul.u32 2, %s13
      $region44: #{tpu_custom_call.1} parent=39 // pred_fallthru
        _
    $region40: #{tpu_custom_call.1} parent=5 // pred_fallthru
      _
    %p237 = scmp.le.s32.totalorder 1, %s13
    %p238 = scmp.lt.s32.totalorder %s13, 3
    %p239 = pnand %p237, %p238
    %p240 = pneg %p239
    // Predicated region
    $region45: #{tpu_custom_call.1} parent=5 // pred_check
      _
    $region46: #{tpu_custom_call.1} parent=5 // pred_check_branch
      %242 = sbr.rel (%p239) target = $region48
    $region47: #{tpu_custom_call.1} parent=5 // pred_region
      %s243 = ssub.s32 %s13, 1
      %s244 = smul.u32 2, %s18
      %p245 = scmp.lt.s32.totalorder %s244, 3
      %s246 = scalar_select %p245, %s244, 3
      %s247 = smul.addr %s246, 8
      %s248 = scalar_lea.vmem %s0, %s247
      %p249 = pneg %p39
      %p250 = pneg %p36
      %p251 = pneg %p60
      %p252 = pneg %p57
      %p253 = pneg %p81
      %p254 = pneg %p78
      %p255 = pneg %p102
      %p256 = pneg %p99
      %p257 = pneg %p123
      %p258 = pneg %p120
      %p259 = pneg %p144
      %p260 = pneg %p141
      %p261 = pneg %p165
      %p262 = pneg %p162
      %p263 = pneg %p191
      %p264 = pneg %p188
      %s265 = smul.u32 2, %s18
      %p266 = scmp.lt.s32.totalorder %s265, 3
      %s267 = scalar_select %p266, %s265, 3
      %s268 = smul.addr %s267, 8
      %s269 = scalar_lea.vmem %s7, %s268
      %s270 = smul.u32 2, %s18
      %p271 = scmp.lt.s32.totalorder %s270, 3
      %s272 = scalar_select %p271, %s270, 3
      %s273 = smul.addr %s272, 8
      %s274 = scalar_lea.vmem %s0, %s273
      %s275 = smul.u32 2, %s18
      %s276 = smul.u32 2, %s18
      %p277 = scmp.lt.s32.totalorder %s276, 3
      %s278 = scalar_select %p277, %s276, 3
      %s279 = smul.addr %s278, 8
      %s280 = scalar_lea.vmem %s7, %s279
      %s281 = smul.u32 2, %s18
      %v282 = vld [vmem:[%s274] sm:$0xff]
      %v283 = vld [vmem:[%s274 + $0x8] sm:$0xff]
      %v284 = vld [vmem:[%s1] sm:$0x7]
      %v285 = vld [vmem:[%s2] sm:$0x1]
      %v287 = vlaneseq
      %v288 = vshrl.u32 %v287, 7
      %v289 = vsub.s32 0, %v288
      %v290 = vrot.slane %v285, %v289
      %vm292 = vcmask 23552
      %v294 = vsel %vm292, %v282, 0
      %v297 = vsel %vm292, %v283, 0
      %vm299 = vcmask 1042432
      %v301 = vsel %vm299, %v284, 0
      %303 = vmatprep.subr.mxu0 0.0
      %304 = vmatpush1.msra.mxu0 %v301
      %305 = vmatprep.subr.mxu0 0.0
      %306 = vmatpush1.msra.mxu0 0.0
      %307 = vmatprep.subr.mxu0 0.0
      %308 = vmatpush1.msra.mxu0 0.0
      %309 = vmatprep.subr.mxu0 0.0
      %310 = vmatpush1.msra.mxu0 0.0
      %311 = vmatprep.subr.mxu0 0.0
      %312 = vmatpush1.msra.mxu0 0.0
      %313 = vmatprep.subr.mxu0 0.0
      %314 = vmatpush1.msra.mxu0 0.0
      %315 = vmatprep.subr.mxu0 0.0
      %316 = vmatpush1.msra.mxu0 0.0
      %317 = vmatprep.subr.mxu0 0.0
      %318 = vmatpush1.msra.mxu0 0.0
      %319 = vmatprep.subr.mxu0 0.0
      %320 = vmatpush1.msra.mxu0 0.0
      %321 = vmatprep.subr.mxu0 0.0
      %322 = vmatpush1.msra.mxu0 0.0
      %323 = vmatprep.subr.mxu0 0.0
      %324 = vmatpush1.msra.mxu0 0.0
      %325 = vmatprep.subr.mxu0 0.0
      %326 = vmatpush1.msra.mxu0 0.0
      %327 = vmatprep.subr.mxu0 0.0
      %328 = vmatpush1.msra.mxu0 0.0
      %329 = vmatprep.subr.mxu0 0.0
      %330 = vmatpush1.msra.mxu0 0.0
      %331 = vmatprep.subr.mxu0 0.0
      %332 = vmatpush1.msra.mxu0 0.0
      %333 = vmatprep.subr.mxu0 0.0
      %334 = vmatpush1.msra.mxu0 0.0
      %335 = vmatprep.subr.mxu0 0.0
      %336 = vmatpush1.msra.mxu0 0.0
      %337 = vmatprep.subr.mxu0 0.0
      %338 = vmatpush1.msra.mxu0 0.0
      %339 = vmatprep.subr.mxu0 0.0
      %340 = vmatpush1.msra.mxu0 0.0
      %341 = vmatprep.subr.mxu0 0.0
      %342 = vmatpush1.msra.mxu0 0.0
      %343 = vmatprep.subr.mxu0 0.0
      %344 = vmatpush1.msra.mxu0 0.0
      %345 = vmatprep.subr.mxu0 0.0
      %346 = vmatpush1.msra.mxu0 0.0
      %347 = vmatprep.subr.mxu0 0.0
      %348 = vmatpush1.msra.mxu0 0.0
      %349 = vmatprep.subr.mxu0 0.0
      %350 = vmatpush1.msra.mxu0 0.0
      %351 = vmatprep.subr.mxu0 0.0
      %352 = vmatpush1.msra.mxu0 0.0
      %353 = vmatprep.subr.mxu0 0.0
      %354 = vmatpush1.msra.mxu0 0.0
      %355 = vmatprep.subr.mxu0 0.0
      %356 = vmatpush1.msra.mxu0 0.0
      %357 = vmatprep.subr.mxu0 0.0
      %358 = vmatpush1.msra.mxu0 0.0
      %359 = vmatprep.subr.mxu0 0.0
      %360 = vmatpush1.msra.mxu0 0.0
      %361 = vmatprep.subr.mxu0 0.0
      %362 = vmatpush1.msra.mxu0 0.0
      %363 = vmatprep.subr.mxu0 0.0
      %364 = vmatpush1.msra.mxu0 0.0
      %365 = vmatprep.subr.mxu0 0.0
      %366 = vmatpush1.msra.mxu0 0.0
      %367 = vmatprep.mubr.f32.mxu0 0.0
      %368 = vmatmul.mubr.f32.gmra.mrb[0].mxu0 %v294
      %v369 = vpop.f32.mrb[0].mxu0
      %v370 = vadd.f32 %v290, %v369
      %v371 = vpop.f32.mrb[0].mxu0
      %372 = vmatprep.mubr.f32.mxu0 0.0
      %373 = vmatmul.mubr.f32.gmra.mrb[0].mxu0 %v297
      %v374 = vpop.f32.mrb[0].mxu0
      %v375 = vadd.f32 %v290, %v374
      %v376 = vpop.f32.mrb[0].mxu0
      %377 = vdwg.mxu0
      %v378 = vand.u32 2147483647, %v370
      %vm379 = vcmp.le.f32.partialorder %v378, 0.7853982
      %vm380 = vcmp.lt.s32.totalorder %v370, 0
      %v381 = vand.u32 %v370, 2139095040
      %v382 = vshrl.u32 %v381, 23
      %v383 = vsub.s32 %v382, 127
      %v384 = vand.u32 2147483647, %v370
      %v385 = vand.u32 %v384, 8388607
      %v386 = vor.u32 %v385, 8388608
      %v387 = vsub.s32 0, %v386
      %v388 = vadd.s32 %v383, 1
      %vm389 = vcmp.gt.s32.totalorder %v388, 0
      %v390 = vsel %vm389, %v388, 0
      %v391 = vshrl.u32 %v390, 5
      %v392 = vand.u32 %v390, 31
      %v393 = vsub.s32 32, %v392
      %v394 = vshrl.u32 683565275, %v393
      %v395 = vshll.u32 683565275, %v392
      %v396 = vshrl.u32 2475754826, %v393
      %v397 = vor.u32 %v395, %v396
      %v398 = vshll.u32 2475754826, %v392
      %v399 = vshrl.u32 2131351028, %v393
      %v400 = vor.u32 %v398, %v399
      %v401 = vshll.u32 2131351028, %v392
      %v402 = vshrl.u32 2102212464, %v393
      %v403 = vor.u32 %v401, %v402
      %v404 = vshll.u32 2102212464, %v392
      %v405 = vshrl.u32 920167782, %v393
      %v406 = vor.u32 %v404, %v405
      %v407 = vshll.u32 920167782, %v392
      %v408 = vshrl.u32 1326507024, %v393
      %v409 = vor.u32 %v407, %v408
      %vm410 = vcmp.lt.s32.totalorder %v391, 1
      %vm411 = vcmp.lt.s32.totalorder %v391, 2
      %vm412 = vcmp.lt.s32.totalorder %v391, 3
      %vm413 = vcmp.lt.s32.totalorder %v391, 4
      %v414 = vsel %vm410, %v394, %v397
      %v415 = vsel %vm413, %v403, 2102212464
      %v416 = vsel %vm412, %v400, %v415
      %v417 = vsel %vm411, %v414, %v416
      %v418 = vsel %vm410, %v397, %v400
      %v419 = vsel %vm413, %v406, 920167782
      %v420 = vsel %vm412, %v403, %v419
      %v421 = vsel %vm411, %v418, %v420
      %v422 = vsel %vm410, %v400, %v403
      %v423 = vsel %vm413, %v409, 1326507024
      %v424 = vsel %vm412, %v406, %v423
      %v425 = vsel %vm411, %v422, %v424
      %v426 = vshll.u32 %v386, 8
      %v427 = vmul.u32.u64.compose %v426, %v425
      %v428 = vextract.low.u32 %v427
      %v429 = vextract.high.u32 %v427
      %v430 = vmul.u32.u64.compose %v426, %v421
      %v431 = vextract.low.u32 %v430
      %v432 = vextract.high.u32 %v430
      %v433 = vmul.u32 %v426, %v417
      %v434 = vadd.s32 %v429, %v431
      %vm435 = vc.u32 %v429, %v431
      %v436 = vadd.s32 %v432, 1
      %v437 = vsel %vm435, %v436, %v432
      %v438 = vadd.s32 %v433, %v437
      %v439 = vadd.s32 %v438, 536870912
      %v440 = vshrl.u32 %v439, 30
      %v441 = vshll.u32 %v440, 30
      %v442 = vsub.s32 %v438, %v441
      %vm443 = vcmp.lt.s32.totalorder %v442, 0
      %v444 = vsub.s32 0, %v442
      %v445 = vsel %vm443, %v444, %v442
      %v446 = vclz %v445
      %v447 = vsub.s32 %v446, 2
      %vm448 = vcmp.gt.s32.totalorder 0, %v447
      %v449 = vsel %vm448, 0, %v447
      %v450 = vsub.s32 32, %v449
      %v451 = vshll.u32 %v442, %v449
      %v452 = vshrl.u32 %v434, %v450
      %v453 = vor.u32 %v451, %v452
      %v454 = vsub.s32 4294967266, %v449
      %v455 = vadd.s32 %v454, 127
      %v456 = vshll.u32 %v455, 23
      %v457 = vor.u32 4788187, %v456
      %v458 = vand.u32 2147483647, %v457
      %v460 = vcvt.s32.f32 %v453
      %v461 = vmul.f32 %v460, %v458
      %v462 = vxor.u32 %v461, 2147483648
      %v463 = vsel %vm380, %v462, %v461
      %v464 = vsub.s32 4, %v440
      %v465 = vsel %vm380, %v464, %v440
      %v466 = vsel %vm379, %v370, %v463
      %v467 = vsel %vm379, 0, %v465
      %v468 = vcosq.f32.pop %v466
      %v469 = vsinq.f32.pop %v466
      %vm470 = vweird.f32 %v370
      %v471 = vadd.s32 %v467, 3
      %v472 = vand.u32 %v471, 3
      %vm473 = vcmp.lt.s32.totalorder %v472, 2
      %vm474 = vcmp.eq.s32.totalorder %v472, 0
      %v475 = vxor.u32 %v469, 2147483648
      %v476 = vsel %vm474, %v468, %v475
      %vm477 = vcmp.eq.s32.totalorder %v472, 2
      %v478 = vxor.u32 %v468, 2147483648
      %v479 = vsel %vm477, %v478, %v469
      %v480 = vsel %vm473, %v476, %v479
      %v481 = vsel %vm470, nan, %v480
      %v482 = vand.u32 2147483647, %v375
      %vm483 = vcmp.le.f32.partialorder %v482, 0.7853982
      %vm484 = vcmp.lt.s32.totalorder %v375, 0
      %v485 = vand.u32 %v375, 2139095040
      %v486 = vshrl.u32 %v485, 23
      %v487 = vsub.s32 %v486, 127
      %v488 = vand.u32 2147483647, %v375
      %v489 = vand.u32 %v488, 8388607
      %v490 = vor.u32 %v489, 8388608
      %v491 = vsub.s32 0, %v490
      %v492 = vadd.s32 %v487, 1
      %vm493 = vcmp.gt.s32.totalorder %v492, 0
      %v494 = vsel %vm493, %v492, 0
      %v495 = vshrl.u32 %v494, 5
      %v496 = vand.u32 %v494, 31
      %v497 = vsub.s32 32, %v496
      %v498 = vshrl.u32 683565275, %v497
      %v499 = vshll.u32 683565275, %v496
      %v500 = vshrl.u32 2475754826, %v497
      %v501 = vor.u32 %v499, %v500
      %v502 = vshll.u32 2475754826, %v496
      %v503 = vshrl.u32 2131351028, %v497
      %v504 = vor.u32 %v502, %v503
      %v505 = vshll.u32 2131351028, %v496
      %v506 = vshrl.u32 2102212464, %v497
      %v507 = vor.u32 %v505, %v506
      %v508 = vshll.u32 2102212464, %v496
      %v509 = vshrl.u32 920167782, %v497
      %v510 = vor.u32 %v508, %v509
      %v511 = vshll.u32 920167782, %v496
      %v512 = vshrl.u32 1326507024, %v497
      %v513 = vor.u32 %v511, %v512
      %vm514 = vcmp.lt.s32.totalorder %v495, 1
      %vm515 = vcmp.lt.s32.totalorder %v495, 2
      %vm516 = vcmp.lt.s32.totalorder %v495, 3
      %vm517 = vcmp.lt.s32.totalorder %v495, 4
      %v518 = vsel %vm514, %v498, %v501
      %v519 = vsel %vm517, %v507, 2102212464
      %v520 = vsel %vm516, %v504, %v519
      %v521 = vsel %vm515, %v518, %v520
      %v522 = vsel %vm514, %v501, %v504
      %v523 = vsel %vm517, %v510, 920167782
      %v524 = vsel %vm516, %v507, %v523
      %v525 = vsel %vm515, %v522, %v524
      %v526 = vsel %vm514, %v504, %v507
      %v527 = vsel %vm517, %v513, 1326507024
      %v528 = vsel %vm516, %v510, %v527
      %v529 = vsel %vm515, %v526, %v528
      %v530 = vshll.u32 %v490, 8
      %v531 = vmul.u32.u64.compose %v530, %v529
      %v532 = vextract.low.u32 %v531
      %v533 = vextract.high.u32 %v531
      %v534 = vmul.u32.u64.compose %v530, %v525
      %v535 = vextract.low.u32 %v534
      %v536 = vextract.high.u32 %v534
      %v537 = vmul.u32 %v530, %v521
      %v538 = vadd.s32 %v533, %v535
      %vm539 = vc.u32 %v533, %v535
      %v540 = vadd.s32 %v536, 1
      %v541 = vsel %vm539, %v540, %v536
      %v542 = vadd.s32 %v537, %v541
      %v543 = vadd.s32 %v542, 536870912
      %v544 = vshrl.u32 %v543, 30
      %v545 = vshll.u32 %v544, 30
      %v546 = vsub.s32 %v542, %v545
      %vm547 = vcmp.lt.s32.totalorder %v546, 0
      %v548 = vsub.s32 0, %v546
      %v549 = vsel %vm547, %v548, %v546
      %v550 = vclz %v549
      %v551 = vsub.s32 %v550, 2
      %vm552 = vcmp.gt.s32.totalorder 0, %v551
      %v553 = vsel %vm552, 0, %v551
      %v554 = vsub.s32 32, %v553
      %v555 = vshll.u32 %v546, %v553
      %v556 = vshrl.u32 %v538, %v554
      %v557 = vor.u32 %v555, %v556
      %v558 = vsub.s32 4294967266, %v553
      %v559 = vadd.s32 %v558, 127
      %v560 = vshll.u32 %v559, 23
      %v561 = vor.u32 4788187, %v560
      %v562 = vand.u32 2147483647, %v561
      %v564 = vcvt.s32.f32 %v557
      %v565 = vmul.f32 %v564, %v562
      %v566 = vxor.u32 %v565, 2147483648
      %v567 = vsel %vm484, %v566, %v565
      %v568 = vsub.s32 4, %v544
      %v569 = vsel %vm484, %v568, %v544
      %v570 = vsel %vm483, %v375, %v567
      %v571 = vsel %vm483, 0, %v569
      %v572 = vcosq.f32.pop %v570
      %v573 = vsinq.f32.pop %v570
      %vm574 = vweird.f32 %v375
      %v575 = vadd.s32 %v571, 3
      %v576 = vand.u32 %v575, 3
      %vm577 = vcmp.lt.s32.totalorder %v576, 2
      %vm578 = vcmp.eq.s32.totalorder %v576, 0
      %v579 = vxor.u32 %v573, 2147483648
      %v580 = vsel %vm578, %v572, %v579
      %vm581 = vcmp.eq.s32.totalorder %v576, 2
      %v582 = vxor.u32 %v572, 2147483648
      %v583 = vsel %vm581, %v582, %v573
      %v584 = vsel %vm577, %v580, %v583
      %v585 = vsel %vm574, nan, %v584
      %v586 = vld [vmem:[%s3] sm:$0xff]
      %v587 = vld [vmem:[%s3 + $0x8] sm:$0xff]
      %v588 = vld [vmem:[%s3 + $0x10] sm:$0xff]
      %v589 = vld [vmem:[%s3 + $0x18] sm:$0xff]
      %v590 = vld [vmem:[%s3 + $0x20] sm:$0xff]
      %v591 = vld [vmem:[%s3 + $0x28] sm:$0xff]
      %v592 = vld [vmem:[%s3 + $0x30] sm:$0xff]
      %v593 = vld [vmem:[%s3 + $0x38] sm:$0xff]
      %v594 = vld [vmem:[%s3 + $0x40] sm:$0xff]
      %v595 = vld [vmem:[%s3 + $0x48] sm:$0xff]
      %v596 = vld [vmem:[%s3 + $0x50] sm:$0xff]
      %v597 = vld [vmem:[%s3 + $0x58] sm:$0xff]
      %v598 = vld [vmem:[%s3 + $0x60] sm:$0xff]
      %v599 = vld [vmem:[%s3 + $0x68] sm:$0xff]
      %v600 = vld [vmem:[%s3 + $0x70] sm:$0xff]
      %v601 = vld [vmem:[%s3 + $0x78] sm:$0xff]
      %v602 = vld [vmem:[%s4] sm:$0x1]
      %v604 = vlaneseq
      %v605 = vshrl.u32 %v604, 7
      %v606 = vsub.s32 0, %v605
      %v607 = vrot.slane %v602, %v606
      %609 = vmatprep.subr.mxu0 0.0
      %610 = vmatpush1.msra.mxu0 %v586
      %611 = vmatprep.subr.mxu0 0.0
      %612 = vmatpush1.msra.mxu0 %v587
      %613 = vmatprep.subr.mxu0 0.0
      %614 = vmatpush1.msra.mxu0 %v588
      %615 = vmatprep.subr.mxu0 0.0
      %616 = vmatpush1.msra.mxu0 %v589
      %617 = vmatprep.subr.mxu0 0.0
      %618 = vmatpush1.msra.mxu0 %v590
      %619 = vmatprep.subr.mxu0 0.0
      %620 = vmatpush1.msra.mxu0 %v591
      %621 = vmatprep.subr.mxu0 0.0
      %622 = vmatpush1.msra.mxu0 %v592
      %623 = vmatprep.subr.mxu0 0.0
      %624 = vmatpush1.msra.mxu0 %v593
      %625 = vmatprep.subr.mxu0 0.0
      %626 = vmatpush1.msra.mxu0 %v594
      %627 = vmatprep.subr.mxu0 0.0
      %628 = vmatpush1.msra.mxu0 %v595
      %629 = vmatprep.subr.mxu0 0.0
      %630 = vmatpush1.msra.mxu0 %v596
      %631 = vmatprep.subr.mxu0 0.0
      %632 = vmatpush1.msra.mxu0 %v597
      %633 = vmatprep.subr.mxu0 0.0
      %634 = vmatpush1.msra.mxu0 %v598
      %635 = vmatprep.subr.mxu0 0.0
      %636 = vmatpush1.msra.mxu0 %v599
      %637 = vmatprep.subr.mxu0 0.0
      %638 = vmatpush1.msra.mxu0 %v600
      %639 = vmatprep.subr.mxu0 0.0
      %640 = vmatpush1.msra.mxu0 %v601
      %641 = vmatprep.subr.mxu0 0.0
      %642 = vmatpush1.msra.mxu0 0.0
      %643 = vmatprep.subr.mxu0 0.0
      %644 = vmatpush1.msra.mxu0 0.0
      %645 = vmatprep.subr.mxu0 0.0
      %646 = vmatpush1.msra.mxu0 0.0
      %647 = vmatprep.subr.mxu0 0.0
      %648 = vmatpush1.msra.mxu0 0.0
      %649 = vmatprep.subr.mxu0 0.0
      %650 = vmatpush1.msra.mxu0 0.0
      %651 = vmatprep.subr.mxu0 0.0
      %652 = vmatpush1.msra.mxu0 0.0
      %653 = vmatprep.subr.mxu0 0.0
      %654 = vmatpush1.msra.mxu0 0.0
      %655 = vmatprep.subr.mxu0 0.0
      %656 = vmatpush1.msra.mxu0 0.0
      %657 = vmatprep.subr.mxu0 0.0
      %658 = vmatpush1.msra.mxu0 0.0
      %659 = vmatprep.subr.mxu0 0.0
      %660 = vmatpush1.msra.mxu0 0.0
      %661 = vmatprep.subr.mxu0 0.0
      %662 = vmatpush1.msra.mxu0 0.0
      %663 = vmatprep.subr.mxu0 0.0
      %664 = vmatpush1.msra.mxu0 0.0
      %665 = vmatprep.subr.mxu0 0.0
      %666 = vmatpush1.msra.mxu0 0.0
      %667 = vmatprep.subr.mxu0 0.0
      %668 = vmatpush1.msra.mxu0 0.0
      %669 = vmatprep.subr.mxu0 0.0
      %670 = vmatpush1.msra.mxu0 0.0
      %671 = vmatprep.subr.mxu0 0.0
      %672 = vmatpush1.msra.mxu0 0.0
      %673 = vmatprep.mubr.f32.mxu0 0.0
      %674 = vmatmul.mubr.f32.gmra.mrb[0].mxu0 %v481
      %v675 = vpop.f32.mrb[0].mxu0
      %v676 = vadd.f32 %v607, %v675
      %v677 = vpop.f32.mrb[0].mxu0
      %678 = vmatprep.mubr.f32.mxu0 0.0
      %679 = vmatmul.mubr.f32.gmra.mrb[0].mxu0 %v585
      %v680 = vpop.f32.mrb[0].mxu0
      %v681 = vadd.f32 %v607, %v680
      %v682 = vpop.f32.mrb[0].mxu0
      %683 = vdwg.mxu0
      %v684 = vand.u32 2147483647, %v676
      %vm685 = vcmp.le.f32.partialorder %v684, 0.7853982
      %vm686 = vcmp.lt.s32.totalorder %v676, 0
      %v687 = vand.u32 %v676, 2139095040
      %v688 = vshrl.u32 %v687, 23
      %v689 = vsub.s32 %v688, 127
      %v690 = vand.u32 2147483647, %v676
      %v691 = vand.u32 %v690, 8388607
      %v692 = vor.u32 %v691, 8388608
      %v693 = vsub.s32 0, %v692
      %v694 = vadd.s32 %v689, 1
      %vm695 = vcmp.gt.s32.totalorder %v694, 0
      %v696 = vsel %vm695, %v694, 0
      %v697 = vshrl.u32 %v696, 5
      %v698 = vand.u32 %v696, 31
      %v699 = vsub.s32 32, %v698
      %v700 = vshrl.u32 683565275, %v699
      %v701 = vshll.u32 683565275, %v698
      %v702 = vshrl.u32 2475754826, %v699
      %v703 = vor.u32 %v701, %v702
      %v704 = vshll.u32 2475754826, %v698
      %v705 = vshrl.u32 2131351028, %v699
      %v706 = vor.u32 %v704, %v705
      %v707 = vshll.u32 2131351028, %v698
      %v708 = vshrl.u32 2102212464, %v699
      %v709 = vor.u32 %v707, %v708
      %v710 = vshll.u32 2102212464, %v698
      %v711 = vshrl.u32 920167782, %v699
      %v712 = vor.u32 %v710, %v711
      %v713 = vshll.u32 920167782, %v698
      %v714 = vshrl.u32 1326507024, %v699
      %v715 = vor.u32 %v713, %v714
      %vm716 = vcmp.lt.s32.totalorder %v697, 1
      %vm717 = vcmp.lt.s32.totalorder %v697, 2
      %vm718 = vcmp.lt.s32.totalorder %v697, 3
      %vm719 = vcmp.lt.s32.totalorder %v697, 4
      %v720 = vsel %vm716, %v700, %v703
      %v721 = vsel %vm719, %v709, 2102212464
      %v722 = vsel %vm718, %v706, %v721
      %v723 = vsel %vm717, %v720, %v722
      %v724 = vsel %vm716, %v703, %v706
      %v725 = vsel %vm719, %v712, 920167782
      %v726 = vsel %vm718, %v709, %v725
      %v727 = vsel %vm717, %v724, %v726
      %v728 = vsel %vm716, %v706, %v709
      %v729 = vsel %vm719, %v715, 1326507024
      %v730 = vsel %vm718, %v712, %v729
      %v731 = vsel %vm717, %v728, %v730
      %v732 = vshll.u32 %v692, 8
      %v733 = vmul.u32.u64.compose %v732, %v731
      %v734 = vextract.low.u32 %v733
      %v735 = vextract.high.u32 %v733
      %v736 = vmul.u32.u64.compose %v732, %v727
      %v737 = vextract.low.u32 %v736
      %v738 = vextract.high.u32 %v736
      %v739 = vmul.u32 %v732, %v723
      %v740 = vadd.s32 %v735, %v737
      %vm741 = vc.u32 %v735, %v737
      %v742 = vadd.s32 %v738, 1
      %v743 = vsel %vm741, %v742, %v738
      %v744 = vadd.s32 %v739, %v743
      %v745 = vadd.s32 %v744, 536870912
      %v746 = vshrl.u32 %v745, 30
      %v747 = vshll.u32 %v746, 30
      %v748 = vsub.s32 %v744, %v747
      %vm749 = vcmp.lt.s32.totalorder %v748, 0
      %v750 = vsub.s32 0, %v748
      %v751 = vsel %vm749, %v750, %v748
      %v752 = vclz %v751
      %v753 = vsub.s32 %v752, 2
      %vm754 = vcmp.gt.s32.totalorder 0, %v753
      %v755 = vsel %vm754, 0, %v753
      %v756 = vsub.s32 32, %v755
      %v757 = vshll.u32 %v748, %v755
      %v758 = vshrl.u32 %v740, %v756
      %v759 = vor.u32 %v757, %v758
      %v760 = vsub.s32 4294967266, %v755
      %v761 = vadd.s32 %v760, 127
      %v762 = vshll.u32 %v761, 23
      %v763 = vor.u32 4788187, %v762
      %v764 = vand.u32 2147483647, %v763
      %v766 = vcvt.s32.f32 %v759
      %v767 = vmul.f32 %v766, %v764
      %v768 = vxor.u32 %v767, 2147483648
      %v769 = vsel %vm686, %v768, %v767
      %v770 = vsub.s32 4, %v746
      %v771 = vsel %vm686, %v770, %v746
      %v772 = vsel %vm685, %v676, %v769
      %v773 = vsel %vm685, 0, %v771
      %v774 = vcosq.f32.pop %v772
      %v775 = vsinq.f32.pop %v772
      %vm776 = vweird.f32 %v676
      %v777 = vadd.s32 %v773, 3
      %v778 = vand.u32 %v777, 3
      %vm779 = vcmp.lt.s32.totalorder %v778, 2
      %vm780 = vcmp.eq.s32.totalorder %v778, 0
      %v781 = vxor.u32 %v775, 2147483648
      %v782 = vsel %vm780, %v774, %v781
      %vm783 = vcmp.eq.s32.totalorder %v778, 2
      %v784 = vxor.u32 %v774, 2147483648
      %v785 = vsel %vm783, %v784, %v775
      %v786 = vsel %vm779, %v782, %v785
      %v787 = vsel %vm776, nan, %v786
      %v788 = vand.u32 2147483647, %v681
      %vm789 = vcmp.le.f32.partialorder %v788, 0.7853982
      %vm790 = vcmp.lt.s32.totalorder %v681, 0
      %v791 = vand.u32 %v681, 2139095040
      %v792 = vshrl.u32 %v791, 23
      %v793 = vsub.s32 %v792, 127
      %v794 = vand.u32 2147483647, %v681
      %v795 = vand.u32 %v794, 8388607
      %v796 = vor.u32 %v795, 8388608
      %v797 = vsub.s32 0, %v796
      %v798 = vadd.s32 %v793, 1
      %vm799 = vcmp.gt.s32.totalorder %v798, 0
      %v800 = vsel %vm799, %v798, 0
      %v801 = vshrl.u32 %v800, 5
      %v802 = vand.u32 %v800, 31
      %v803 = vsub.s32 32, %v802
      %v804 = vshrl.u32 683565275, %v803
      %v805 = vshll.u32 683565275, %v802
      %v806 = vshrl.u32 2475754826, %v803
      %v807 = vor.u32 %v805, %v806
      %v808 = vshll.u32 2475754826, %v802
      %v809 = vshrl.u32 2131351028, %v803
      %v810 = vor.u32 %v808, %v809
      %v811 = vshll.u32 2131351028, %v802
      %v812 = vshrl.u32 2102212464, %v803
      %v813 = vor.u32 %v811, %v812
      %v814 = vshll.u32 2102212464, %v802
      %v815 = vshrl.u32 920167782, %v803
      %v816 = vor.u32 %v814, %v815
      %v817 = vshll.u32 920167782, %v802
      %v818 = vshrl.u32 1326507024, %v803
      %v819 = vor.u32 %v817, %v818
      %vm820 = vcmp.lt.s32.totalorder %v801, 1
      %vm821 = vcmp.lt.s32.totalorder %v801, 2
      %vm822 = vcmp.lt.s32.totalorder %v801, 3
      %vm823 = vcmp.lt.s32.totalorder %v801, 4
      %v824 = vsel %vm820, %v804, %v807
      %v825 = vsel %vm823, %v813, 2102212464
      %v826 = vsel %vm822, %v810, %v825
      %v827 = vsel %vm821, %v824, %v826
      %v828 = vsel %vm820, %v807, %v810
      %v829 = vsel %vm823, %v816, 920167782
      %v830 = vsel %vm822, %v813, %v829
      %v831 = vsel %vm821, %v828, %v830
      %v832 = vsel %vm820, %v810, %v813
      %v833 = vsel %vm823, %v819, 1326507024
      %v834 = vsel %vm822, %v816, %v833
      %v835 = vsel %vm821, %v832, %v834
      %v836 = vshll.u32 %v796, 8
      %v837 = vmul.u32.u64.compose %v836, %v835
      %v838 = vextract.low.u32 %v837
      %v839 = vextract.high.u32 %v837
      %v840 = vmul.u32.u64.compose %v836, %v831
      %v841 = vextract.low.u32 %v840
      %v842 = vextract.high.u32 %v840
      %v843 = vmul.u32 %v836, %v827
      %v844 = vadd.s32 %v839, %v841
      %vm845 = vc.u32 %v839, %v841
      %v846 = vadd.s32 %v842, 1
      %v847 = vsel %vm845, %v846, %v842
      %v848 = vadd.s32 %v843, %v847
      %v849 = vadd.s32 %v848, 536870912
      %v850 = vshrl.u32 %v849, 30
      %v851 = vshll.u32 %v850, 30
      %v852 = vsub.s32 %v848, %v851
      %vm853 = vcmp.lt.s32.totalorder %v852, 0
      %v854 = vsub.s32 0, %v852
      %v855 = vsel %vm853, %v854, %v852
      %v856 = vclz %v855
      %v857 = vsub.s32 %v856, 2
      %vm858 = vcmp.gt.s32.totalorder 0, %v857
      %v859 = vsel %vm858, 0, %v857
      %v860 = vsub.s32 32, %v859
      %v861 = vshll.u32 %v852, %v859
      %v862 = vshrl.u32 %v844, %v860
      %v863 = vor.u32 %v861, %v862
      %v864 = vsub.s32 4294967266, %v859
      %v865 = vadd.s32 %v864, 127
      %v866 = vshll.u32 %v865, 23
      %v867 = vor.u32 4788187, %v866
      %v868 = vand.u32 2147483647, %v867
      %v870 = vcvt.s32.f32 %v863
      %v871 = vmul.f32 %v870, %v868
      %v872 = vxor.u32 %v871, 2147483648
      %v873 = vsel %vm790, %v872, %v871
      %v874 = vsub.s32 4, %v850
      %v875 = vsel %vm790, %v874, %v850
      %v876 = vsel %vm789, %v681, %v873
      %v877 = vsel %vm789, 0, %v875
      %v878 = vcosq.f32.pop %v876
      %v879 = vsinq.f32.pop %v876
      %vm880 = vweird.f32 %v681
      %v881 = vadd.s32 %v877, 3
      %v882 = vand.u32 %v881, 3
      %vm883 = vcmp.lt.s32.totalorder %v882, 2
      %vm884 = vcmp.eq.s32.totalorder %v882, 0
      %v885 = vxor.u32 %v879, 2147483648
      %v886 = vsel %vm884, %v878, %v885
      %vm887 = vcmp.eq.s32.totalorder %v882, 2
      %v888 = vxor.u32 %v878, 2147483648
      %v889 = vsel %vm887, %v888, %v879
      %v890 = vsel %vm883, %v886, %v889
      %v891 = vsel %vm880, nan, %v890
      %v892 = vld [vmem:[%s5] sm:$0xff]
      %v893 = vld [vmem:[%s5 + $0x8] sm:$0xff]
      %v894 = vld [vmem:[%s5 + $0x10] sm:$0xff]
      %v895 = vld [vmem:[%s5 + $0x18] sm:$0xff]
      %v896 = vld [vmem:[%s5 + $0x20] sm:$0xff]
      %v897 = vld [vmem:[%s5 + $0x28] sm:$0xff]
      %v898 = vld [vmem:[%s5 + $0x30] sm:$0xff]
      %v899 = vld [vmem:[%s5 + $0x38] sm:$0xff]
      %v900 = vld [vmem:[%s5 + $0x40] sm:$0xff]
      %v901 = vld [vmem:[%s5 + $0x48] sm:$0xff]
      %v902 = vld [vmem:[%s5 + $0x50] sm:$0xff]
      %v903 = vld [vmem:[%s5 + $0x58] sm:$0xff]
      %v904 = vld [vmem:[%s5 + $0x60] sm:$0xff]
      %v905 = vld [vmem:[%s5 + $0x68] sm:$0xff]
      %v906 = vld [vmem:[%s5 + $0x70] sm:$0xff]
      %v907 = vld [vmem:[%s5 + $0x78] sm:$0xff]
      %v908 = vld [vmem:[%s6] sm:$0x1]
      %v910 = vlaneseq
      %v911 = vshrl.u32 %v910, 7
      %v912 = vsub.s32 0, %v911
      %v913 = vrot.slane %v908, %v912
      %915 = vmatprep.subr.mxu0 0.0
      %916 = vmatpush1.msra.mxu0 %v892
      %917 = vmatprep.subr.mxu0 0.0
      %918 = vmatpush1.msra.mxu0 %v893
      %919 = vmatprep.subr.mxu0 0.0
      %920 = vmatpush1.msra.mxu0 %v894
      %921 = vmatprep.subr.mxu0 0.0
      %922 = vmatpush1.msra.mxu0 %v895
      %923 = vmatprep.subr.mxu0 0.0
      %924 = vmatpush1.msra.mxu0 %v896
      %925 = vmatprep.subr.mxu0 0.0
      %926 = vmatpush1.msra.mxu0 %v897
      %927 = vmatprep.subr.mxu0 0.0
      %928 = vmatpush1.msra.mxu0 %v898
      %929 = vmatprep.subr.mxu0 0.0
      %930 = vmatpush1.msra.mxu0 %v899
      %931 = vmatprep.subr.mxu0 0.0
      %932 = vmatpush1.msra.mxu0 %v900
      %933 = vmatprep.subr.mxu0 0.0
      %934 = vmatpush1.msra.mxu0 %v901
      %935 = vmatprep.subr.mxu0 0.0
      %936 = vmatpush1.msra.mxu0 %v902
      %937 = vmatprep.subr.mxu0 0.0
      %938 = vmatpush1.msra.mxu0 %v903
      %939 = vmatprep.subr.mxu0 0.0
      %940 = vmatpush1.msra.mxu0 %v904
      %941 = vmatprep.subr.mxu0 0.0
      %942 = vmatpush1.msra.mxu0 %v905
      %943 = vmatprep.subr.mxu0 0.0
      %944 = vmatpush1.msra.mxu0 %v906
      %945 = vmatprep.subr.mxu0 0.0
      %946 = vmatpush1.msra.mxu0 %v907
      %947 = vmatprep.subr.mxu0 0.0
      %948 = vmatpush1.msra.mxu0 0.0
      %949 = vmatprep.subr.mxu0 0.0
      %950 = vmatpush1.msra.mxu0 0.0
      %951 = vmatprep.subr.mxu0 0.0
      %952 = vmatpush1.msra.mxu0 0.0
      %953 = vmatprep.subr.mxu0 0.0
      %954 = vmatpush1.msra.mxu0 0.0
      %955 = vmatprep.subr.mxu0 0.0
      %956 = vmatpush1.msra.mxu0 0.0
      %957 = vmatprep.subr.mxu0 0.0
      %958 = vmatpush1.msra.mxu0 0.0
      %959 = vmatprep.subr.mxu0 0.0
      %960 = vmatpush1.msra.mxu0 0.0
      %961 = vmatprep.subr.mxu0 0.0
      %962 = vmatpush1.msra.mxu0 0.0
      %963 = vmatprep.subr.mxu0 0.0
      %964 = vmatpush1.msra.mxu0 0.0
      %965 = vmatprep.subr.mxu0 0.0
      %966 = vmatpush1.msra.mxu0 0.0
      %967 = vmatprep.subr.mxu0 0.0
      %968 = vmatpush1.msra.mxu0 0.0
      %969 = vmatprep.subr.mxu0 0.0
      %970 = vmatpush1.msra.mxu0 0.0
      %971 = vmatprep.subr.mxu0 0.0
      %972 = vmatpush1.msra.mxu0 0.0
      %973 = vmatprep.subr.mxu0 0.0
      %974 = vmatpush1.msra.mxu0 0.0
      %975 = vmatprep.subr.mxu0 0.0
      %976 = vmatpush1.msra.mxu0 0.0
      %977 = vmatprep.subr.mxu0 0.0
      %978 = vmatpush1.msra.mxu0 0.0
      %979 = vmatprep.mubr.f32.mxu0 0.0
      %980 = vmatmul.mubr.f32.gmra.mrb[0].mxu0 %v787
      %v981 = vpop.f32.mrb[0].mxu0
      %v982 = vadd.f32 %v913, %v981
      %v983 = vpop.f32.mrb[0].mxu0
      %984 = vmatprep.mubr.f32.mxu0 0.0
      %985 = vmatmul.mubr.f32.gmra.mrb[0].mxu0 %v891
      %v986 = vpop.f32.mrb[0].mxu0
      %v987 = vadd.f32 %v913, %v986
      %v988 = vpop.f32.mrb[0].mxu0
      %989 = vdwg.mxu0
      %vm990 = vcmask 130048
      %991 = vst.msk [vmem:[%s280] sm:$0xff] %vm990, %v982
      %992 = vst.msk [vmem:[%s280 + $0x8] sm:$0xff] %vm990, %v987
      %s993 = smul.u32 2, %s18
      %p994 = scmp.lt.s32.totalorder %s993, 3
      %s995 = scalar_select %p994, %s993, 3
      %s996 = smul.addr %s995, 8
      %s997 = scalar_lea.vmem %s7, %s996
      // Predicated region
      $region49: #{tpu_custom_call.1} parent=47 // pred_check
        %p998 = pneg %p188
      $region50: #{tpu_custom_call.1} parent=47 // pred_check_branch
        %1000 = sbr.rel (%p998) target = $region52
      $region51: #{tpu_custom_call.1} parent=47 // pred_region
        %s1001 = smul.u32 2, %s18
      $region52: #{tpu_custom_call.1} parent=47 // pred_fallthru
        _
    $region48: #{tpu_custom_call.1} parent=5 // pred_fallthru
      _
    %p1002 = scmp.le.s32.totalorder 2, %s13
    // Predicated region
    $region53: #{tpu_custom_call.1} parent=5 // pred_check
      %p1003 = pneg %p1002
    $region54: #{tpu_custom_call.1} parent=5 // pred_check_branch
      %1005 = sbr.rel (%p1003) target = $region56
    $region55: #{tpu_custom_call.1} parent=5 // pred_region
      %s1006 = ssub.s32 %s13, 2
      // Predicated region
      $region57: #{tpu_custom_call.1} parent=55 // pred_check
        %p1007 = pneg %p194
      $region58: #{tpu_custom_call.1} parent=55 // pred_check_branch
        %1009 = sbr.rel (%p1007) target = $region60
      $region59: #{tpu_custom_call.1} parent=55 // pred_region
        %s1010 = smul.u32 2, %s19
        %p1011 = scmp.lt.s32.totalorder %s1010, 3
        %s1012 = scalar_select %p1011, %s1010, 3
        %s1013 = smul.addr %s1012, 8
        %s1014 = scalar_lea.vmem %s7, %s1013
      $region60: #{tpu_custom_call.1} parent=55 // pred_fallthru
        _
    $region56: #{tpu_custom_call.1} parent=5 // pred_fallthru
      _
  $region6: #{tpu_custom_call.1} parent=0 // loop_footer
    %s17 = sadd.s32 1, %s13
  $region7: #{tpu_custom_call.1} parent=0 // loop_footer_branch
    %12 = sbr.rel target = $region3
  $region8: #{tpu_custom_call.1} parent=0 // loop_exit
    _

</llo_original>
